<compile_context>
chip_gen: v5e
topology: v5e:2x2
jax: 0.10.0
libtpu: 0.0.40
codegen_flags: <defaults>
</compile_context>

<pallas_src>
import jax
import jax.numpy as jnp
from jax import lax
from jax.experimental import pallas as pl
from jax.experimental.pallas import tpu as pltpu


def _round_up(x: int, m: int) -> int:
    return ((x + m - 1) // m) * m


def _vmem_capacity_bytes() -> int:
    """Generation-aware VMEM capacity; conservative fallback = v7x per-TC."""
    try:
        cap = int(pltpu.get_tpu_info().vmem_capacity_bytes)
        if cap > 0:
            return cap
    except Exception:
        pass
    return 64 * 1024 * 1024


def _pick_dh(d_hid: int, dh_req: int) -> int:
    """Largest divisor of d_hid that is a multiple of 256 (preferred, full MXU
    width on v6e/v7x) or 128, bounded by dh_req. Falls back to d_hid."""
    for align in (256, 128):
        best = 0
        c = align
        while c <= min(dh_req, d_hid):
            if d_hid % c == 0:
                best = c
            c += align
        if best:
            return best
    return d_hid


def _const_spec(shape):
    """BlockSpec for an array whose block index never changes: single-buffered."""
    idx = lambda *args: (0,) * len(shape)
    try:
        return pl.BlockSpec(shape, idx, pipeline_mode=pl.Buffered(1))
    except Exception:  # older jax without pipeline_mode / Buffered(1)
        return pl.BlockSpec(shape, idx)


def _layer_norm_f32(y, gamma, beta):
    d = y.shape[-1]
    inv_d = 1.0 / d
    mean = jnp.sum(y, axis=-1, keepdims=True) * inv_d
    centered = y - mean
    var = jnp.sum(centered * centered, axis=-1, keepdims=True) * inv_d
    inv = lax.rsqrt(var + 1e-6)
    return centered * inv * gamma.astype(jnp.float32) + beta.astype(jnp.float32)


# --------------------------------------------------------------------------- #
# Path A: weights resident in VMEM, single row-tile grid axis.                #
# --------------------------------------------------------------------------- #
def _make_resident_kernel(n_chunks: int, dh: int):
    def kernel(x_ref, w1_ref, b1_ref, w2_ref, b2_ref, g_ref, beta_ref, o_ref):
        tm = x_ref.shape[0]
        d_in = o_ref.shape[-1]
        # MXU operands in native weight dtype (bf16 stays bf16), f32 accumulate.
        x_mm = x_ref[...].astype(w1_ref.dtype)

        if n_chunks == 1:
            h = jnp.dot(x_mm, w1_ref[...], preferred_element_type=jnp.float32)
            h = jnp.maximum(h + b1_ref[...].astype(jnp.float32), 0.0)
            acc = jnp.dot(h.astype(w2_ref.dtype), w2_ref[...],
                          preferred_element_type=jnp.float32)
        else:
            def body(c, acc):
                lo = pl.multiple_of(c * dh, dh)
                h = jnp.dot(x_mm, w1_ref[:, pl.ds(lo, dh)],
                            preferred_element_type=jnp.float32)
                h = jnp.maximum(h + b1_ref[:, pl.ds(lo, dh)].astype(jnp.float32),
                                0.0)
                return acc + jnp.dot(h.astype(w2_ref.dtype),
                                     w2_ref[pl.ds(lo, dh), :],
                                     preferred_element_type=jnp.float32)
            acc = lax.fori_loop(0, n_chunks, body,
                                jnp.zeros((tm, d_in), jnp.float32), unroll=2)

        # dropout (identity at inference) + bias + residual.
        # Residual read here (not before the loop) to keep the matmul-phase
        # live set small.
        y = acc + b2_ref[...].astype(jnp.float32) + x_ref[...].astype(jnp.float32)
        o_ref[...] = _layer_norm_f32(y, g_ref[...], beta_ref[...]).astype(o_ref.dtype)

    return kernel


# --------------------------------------------------------------------------- #
# Path B: weights streamed over a second ("arbitrary") d_hid grid axis.       #
# For large weights / v7x's 64 MiB per-TC VMEM.                               #
# --------------------------------------------------------------------------- #
def _stream_kernel(x_ref, w1_ref, b1_ref, w2_ref, b2_ref, g_ref, beta_ref,
                   o_ref, acc_ref):
    k = pl.program_id(1)

    @pl.when(k == 0)
    def _():
        acc_ref[...] = jnp.zeros_like(acc_ref)

    x_mm = x_ref[...].astype(w1_ref.dtype)
    h = jnp.dot(x_mm, w1_ref[...], preferred_element_type=jnp.float32)
    h = jnp.maximum(h + b1_ref[...].astype(jnp.float32), 0.0)
    acc_ref[...] += jnp.dot(h.astype(w2_ref.dtype), w2_ref[...],
                            preferred_element_type=jnp.float32)

    @pl.when(k == pl.num_programs(1) - 1)
    def _():
        y = (acc_ref[...] + b2_ref[...].astype(jnp.float32)
             + x_ref[...].astype(jnp.float32))
        o_ref[...] = _layer_norm_f32(y, g_ref[...], beta_ref[...]).astype(o_ref.dtype)


def positionwise_feed_forward(x, w1, b1, w2, b2, gamma, beta, *,
                              tm=None, dh_chunk: int = 512,
                              stream_weights=None, matmul_dtype=None):
    """x: [B, S, d_in]. Weights stored as (in, out) so the kernel does x @ W.

    matmul_dtype: optionally cast weights (e.g. to bf16 on v5e) for faster MXU
    passes while keeping f32 accumulation; default keeps native dtypes.
    """
    B, S, d_in = x.shape
    d_hid = w1.shape[1]
    M = B * S

    if matmul_dtype is not None:
        w1 = w1.astype(matmul_dtype)
        w2 = w2.astype(matmul_dtype)

    vmem_cap = _vmem_capacity_bytes()

    # Generation-aware default row tile: 512 on 128-MiB VMEM chips (v5e/v6e),
    # 256 on v7x (64 MiB per TensorCore).
    if tm is None:
        tm = 512 if vmem_cap >= (100 << 20) else 256

    # Pad rows only to a sublane multiple; ragged last tile is masked by Pallas.
    M_8 = _round_up(M, 8)
    tm_eff = max(8, min(_round_up(tm, 8), M_8))
    # Guarantee >= 2 row tiles when possible so the "parallel" axis can be
    # sharded across v7x's two TensorCores.
    if pl.cdiv(M_8, tm_eff) < 2 and M_8 > 8:
        tm_eff = max(8, _round_up((M_8 + 1) // 2, 8))
    n_row = pl.cdiv(M_8, tm_eff)

    # Hidden-dim chunk: exact divisor of d_hid, aligned to 256 when possible.
    dh = _pick_dh(d_hid, dh_chunk)
    n_chunks = d_hid // dh

    x2 = x.reshape(M, d_in)
    if M_8 != M:
        x2 = jnp.pad(x2, ((0, M_8 - M), (0, 0)))

    b1_2 = b1.reshape(1, d_hid)
    b2_2 = b2.reshape(1, d_in)
    g2 = gamma.reshape(1, d_in)
    be2 = beta.reshape(1, d_in)

    itm = lambda a: jnp.dtype(a.dtype).itemsize
    w_item = itm(w1)
    small_bytes = (b1.size + b2.size + gamma.size + beta.size) * 4

    # ---- VMEM budgets (Buffered(1) => one copy of resident weights).
    io_tiles = 2 * 2 * tm_eff * d_in * itm(x2)                 # x + out, dbl-buffered
    resident_w = (w1.size + w2.size) * w_item + small_bytes
    resident_live = 4 * tm_eff * (dh + 2 * d_in) + tm_eff * d_in * w_item
    resident_need = io_tiles + resident_w + resident_live

    stream_w = 2 * (2 * d_in * dh + dh) * w_item + small_bytes  # dbl-buffered tiles
    stream_need = (io_tiles + stream_w + 4 * tm_eff * d_in      # acc scratch
                   + 4 * tm_eff * (d_in + dh))

    if stream_weights is None:
        stream_weights = resident_need > 0.55 * vmem_cap

    need = stream_need if stream_weights else resident_need
    vmem_limit = int(min(max(int(1.5 * need), 32 << 20), int(0.85 * vmem_cap)))

    # ---- Advisory cost estimate.
    flops = 4 * M_8 * d_in * d_hid
    weight_bytes = (w1.size + w2.size) * w_item
    bytes_accessed = (2 * M_8 * d_in * itm(x2)
                      + weight_bytes * (n_row if stream_weights else 1)
                      + small_bytes)
    cost = pl.CostEstimate(flops=flops, transcendentals=M_8,
                           bytes_accessed=bytes_accessed)

    if stream_weights:
        grid = (n_row, n_chunks)
        in_specs = [
            pl.BlockSpec((tm_eff, d_in), lambda i, k: (i, 0)),   # x tile (resident over k)
            pl.BlockSpec((d_in, dh), lambda i, k: (0, k)),       # w1 chunk (streamed)
            pl.BlockSpec((1, dh), lambda i, k: (0, k)),          # b1 chunk
            pl.BlockSpec((dh, d_in), lambda i, k: (k, 0)),       # w2 chunk (streamed)
            _const_spec((1, d_in)),                              # b2
            _const_spec((1, d_in)),                              # gamma
            _const_spec((1, d_in)),                              # beta
        ]
        out_specs = pl.BlockSpec((tm_eff, d_in), lambda i, k: (i, 0))
        kernel = _stream_kernel
        scratch = [pltpu.VMEM((tm_eff, d_in), jnp.float32)]
        dim_sem = ("parallel", "arbitrary")
    else:
        grid = (n_row,)
        in_specs = [
            pl.BlockSpec((tm_eff, d_in), lambda i: (i, 0)),      # x tile
            _const_spec((d_in, d_hid)),                          # w1 (resident, 1 buf)
            _const_spec((1, d_hid)),                             # b1
            _const_spec((d_hid, d_in)),                          # w2 (resident, 1 buf)
            _const_spec((1, d_in)),                              # b2
            _const_spec((1, d_in)),                              # gamma
            _const_spec((1, d_in)),                              # beta
        ]
        out_specs = pl.BlockSpec((tm_eff, d_in), lambda i: (i, 0))
        kernel = _make_resident_kernel(n_chunks, dh)
        scratch = []
        dim_sem = ("parallel",)

    out = pl.pallas_call(
        kernel,
        out_shape=jax.ShapeDtypeStruct((M_8, d_in), x.dtype),
        grid_spec=pltpu.PrefetchScalarGridSpec(
            num_scalar_prefetch=0,
            grid=grid,
            in_specs=in_specs,
            out_specs=out_specs,
            scratch_shapes=tuple(scratch),
        ),
        compiler_params=pltpu.CompilerParams(
            dimension_semantics=dim_sem,
            vmem_limit_bytes=vmem_limit),
        cost_estimate=cost,
    )(x2, w1, b1_2, w2, b2_2, g2, be2)

    if M_8 != M:
        out = out[:M]
    return out.reshape(B, S, d_in)


def _reference(x, w1, b1, w2, b2, gamma, beta):
    xf = x.astype(jnp.float32)
    w1f, b1f = w1.astype(jnp.float32), b1.astype(jnp.float32)
    w2f, b2f = w2.astype(jnp.float32), b2.astype(jnp.float32)
    gf, bf = gamma.astype(jnp.float32), beta.astype(jnp.float32)
    h = jnp.maximum(xf @ w1f + b1f, 0.0)
    y = h @ w2f + b2f + xf
    mean = y.mean(-1, keepdims=True)
    var = ((y - mean) ** 2).mean(-1, keepdims=True)
    return (y - mean) * lax.rsqrt(var + 1e-6) * gf + bf


if __name__ == "__main__":
    # ---- Test 1: small f32 toy shape (matches the module spec), resident path.
    key = jax.random.PRNGKey(0)
    B, S, d_in, d_hid = 2, 8, 32, 64
    k_x, k_w1, k_b1, k_w2, k_b2 = jax.random.split(key, 5)
    x = jax.random.normal(k_x, (B, S, d_in), dtype=jnp.float32)
    # Stored as (in, out) so the kernel computes x @ W (== x @ W_torch.T).
    w1 = jax.random.normal(k_w1, (d_in, d_hid), dtype=jnp.float32) * 0.1
    b1 = jax.random.normal(k_b1, (d_hid,), dtype=jnp.float32) * 0.1
    w2 = jax.random.normal(k_w2, (d_hid, d_in), dtype=jnp.float32) * 0.1
    b2 = jax.random.normal(k_b2, (d_in,), dtype=jnp.float32) * 0.1
    gamma = jnp.ones((d_in,), dtype=jnp.float32)
    beta = jnp.zeros((d_in,), dtype=jnp.float32)

    out = jax.block_until_ready(
        positionwise_feed_forward(x, w1, b1, w2, b2, gamma, beta))
    ref = _reference(x, w1, b1, w2, b2, gamma, beta)
    assert out.shape == (B, S, d_in)
    assert jnp.allclose(out, ref, atol=1e-4, rtol=1e-4), "f32 mismatch vs reference"

    # ---- Test 2: bf16, resident path with chunked hidden dim (fori_loop path).
    B2, S2, di2, dh2 = 2, 256, 128, 512
    k = jax.random.PRNGKey(1)
    k_x, k_w1, k_b1, k_w2, k_b2 = jax.random.split(k, 5)
    xb = jax.random.normal(k_x, (B2, S2, di2), jnp.float32).astype(jnp.bfloat16)
    w1b = (jax.random.normal(k_w1, (di2, dh2), jnp.float32) * 0.05).astype(jnp.bfloat16)
    b1b = (jax.random.normal(k_b1, (dh2,), jnp.float32) * 0.05).astype(jnp.bfloat16)
    w2b = (jax.random.normal(k_w2, (dh2, di2), jnp.float32) * 0.05).astype(jnp.bfloat16)
    b2b = (jax.random.normal(k_b2, (di2,), jnp.float32) * 0.05).astype(jnp.bfloat16)
    gb = jnp.ones((di2,), jnp.bfloat16)
    bb = jnp.zeros((di2,), jnp.bfloat16)
    refb = _reference(xb, w1b, b1b, w2b, b2b, gb, bb)

    outb = jax.block_until_ready(
        positionwise_feed_forward(xb, w1b, b1b, w2b, b2b, gb, bb,
                                  dh_chunk=256, stream_weights=False))
    assert outb.shape == (B2, S2, di2) and outb.dtype == jnp.bfloat16
    assert jnp.allclose(outb.astype(jnp.float32), refb, atol=5e-2, rtol=5e-2), \
        "bf16 resident-path mismatch vs reference"

    # ---- Test 3: same data through the weight-streaming path (v7x fallback).
    outs = jax.block_until_ready(
        positionwise_feed_forward(xb, w1b, b1b, w2b, b2b, gb, bb,
                                  dh_chunk=256, stream_weights=True))
    assert outs.shape == (B2, S2, di2) and outs.dtype == jnp.bfloat16
    assert jnp.allclose(outs.astype(jnp.float32), refb, atol=5e-2, rtol=5e-2), \
        "bf16 streaming-path mismatch vs reference"

    print("KERNEL_OK")
</pallas_src>

<mosaic_0001>
module attributes {stable_mosaic.version = 11 : i64} {
  func.func @kernel(%arg0: i32, %arg1: memref<8x32xf32, #tpu.memory_space<vmem>>, %arg2: memref<32x64xf32, #tpu.memory_space<vmem>>, %arg3: memref<1x64xf32, #tpu.memory_space<vmem>>, %arg4: memref<64x32xf32, #tpu.memory_space<vmem>>, %arg5: memref<1x32xf32, #tpu.memory_space<vmem>>, %arg6: memref<1x32xf32, #tpu.memory_space<vmem>>, %arg7: memref<1x32xf32, #tpu.memory_space<vmem>>, %arg8: memref<8x32xf32, #tpu.memory_space<vmem>>) attributes {dimension_semantics = [#tpu.dimension_semantics<parallel>], iteration_bounds = array<i64: 2>, scalar_prefetch = 0 : i64, scratch_operands = 0 : i64, tpu.core_type = #tpu.core_type<tc>, window_params = [{transform_indices = @transform_0, window_bounds = array<i64: 8, 32>}, {pipeline_mode = #tpu.pipeline_mode<synchronous>, transform_indices = @transform_1, window_bounds = array<i64: 32, 64>}, {pipeline_mode = #tpu.pipeline_mode<synchronous>, transform_indices = @transform_2, window_bounds = array<i64: 1, 64>}, {pipeline_mode = #tpu.pipeline_mode<synchronous>, transform_indices = @transform_3, window_bounds = array<i64: 64, 32>}, {pipeline_mode = #tpu.pipeline_mode<synchronous>, transform_indices = @transform_4, window_bounds = array<i64: 1, 32>}, {pipeline_mode = #tpu.pipeline_mode<synchronous>, transform_indices = @transform_5, window_bounds = array<i64: 1, 32>}, {pipeline_mode = #tpu.pipeline_mode<synchronous>, transform_indices = @transform_6, window_bounds = array<i64: 1, 32>}, {transform_indices = @transform_7, window_bounds = array<i64: 8, 32>}]} {
    %c0 = arith.constant 0 : index
    %c0_0 = arith.constant 0 : index
    %0 = vector.load %arg1[%c0, %c0_0] : memref<8x32xf32, #tpu.memory_space<vmem>>, vector<8x32xf32>
    %c0_1 = arith.constant 0 : index
    %c0_2 = arith.constant 0 : index
    %1 = vector.load %arg2[%c0_1, %c0_2] : memref<32x64xf32, #tpu.memory_space<vmem>>, vector<32x64xf32>
    %cst = arith.constant dense<0.000000e+00> : vector<8x64xf32>
    %2 = tpu.matmul %0, %1, %cst {dimension_numbers = #tpu.dot_dimension_numbers<[1], [0], [0], [1], [0, 0, 1, 1], [], []>} : vector<8x32xf32>, vector<32x64xf32>, vector<8x64xf32> -> vector<8x64xf32>
    %c0_3 = arith.constant 0 : index
    %c0_4 = arith.constant 0 : index
    %3 = vector.load %arg3[%c0_3, %c0_4] : memref<1x64xf32, #tpu.memory_space<vmem>>, vector<1x64xf32>
    %4 = vector.broadcast %3 : vector<1x64xf32> to vector<8x64xf32>
    %5 = arith.addf %2, %4 : vector<8x64xf32>
    %cst_5 = arith.constant 0.000000e+00 : f32
    %6 = vector.broadcast %cst_5 : f32 to vector<8x64xf32>
    %7 = arith.maximumf %5, %6 : vector<8x64xf32>
    %c0_6 = arith.constant 0 : index
    %c0_7 = arith.constant 0 : index
    %8 = vector.load %arg4[%c0_6, %c0_7] : memref<64x32xf32, #tpu.memory_space<vmem>>, vector<64x32xf32>
    %cst_8 = arith.constant dense<0.000000e+00> : vector<8x32xf32>
    %9 = tpu.matmul %7, %8, %cst_8 {dimension_numbers = #tpu.dot_dimension_numbers<[1], [0], [0], [1], [0, 0, 1, 1], [], []>} : vector<8x64xf32>, vector<64x32xf32>, vector<8x32xf32> -> vector<8x32xf32>
    %c0_9 = arith.constant 0 : index
    %c0_10 = arith.constant 0 : index
    %10 = vector.load %arg5[%c0_9, %c0_10] : memref<1x32xf32, #tpu.memory_space<vmem>>, vector<1x32xf32>
    %11 = vector.broadcast %10 : vector<1x32xf32> to vector<8x32xf32>
    %12 = arith.addf %9, %11 : vector<8x32xf32>
    %c0_11 = arith.constant 0 : index
    %c0_12 = arith.constant 0 : index
    %13 = vector.load %arg1[%c0_11, %c0_12] : memref<8x32xf32, #tpu.memory_space<vmem>>, vector<8x32xf32>
    %14 = arith.addf %12, %13 : vector<8x32xf32>
    %c0_13 = arith.constant 0 : index
    %c0_14 = arith.constant 0 : index
    %15 = vector.load %arg6[%c0_13, %c0_14] : memref<1x32xf32, #tpu.memory_space<vmem>>, vector<1x32xf32>
    %c0_15 = arith.constant 0 : index
    %c0_16 = arith.constant 0 : index
    %16 = vector.load %arg7[%c0_15, %c0_16] : memref<1x32xf32, #tpu.memory_space<vmem>>, vector<1x32xf32>
    %cst_17 = arith.constant dense<0.000000e+00> : vector<8xf32>
    %17 = vector.multi_reduction <add>, %14, %cst_17 [1] : vector<8x32xf32> to vector<8xf32>
    %18 = vector.shape_cast %17 : vector<8xf32> to vector<8x1xf32>
    %cst_18 = arith.constant 3.125000e-02 : f32
    %19 = vector.broadcast %cst_18 : f32 to vector<8x1xf32>
    %20 = arith.mulf %18, %19 : vector<8x1xf32>
    %21 = vector.broadcast %20 : vector<8x1xf32> to vector<8x32xf32>
    %22 = arith.subf %14, %21 : vector<8x32xf32>
    %23 = arith.mulf %22, %22 : vector<8x32xf32>
    %cst_19 = arith.constant dense<0.000000e+00> : vector<8xf32>
    %24 = vector.multi_reduction <add>, %23, %cst_19 [1] : vector<8x32xf32> to vector<8xf32>
    %25 = vector.shape_cast %24 : vector<8xf32> to vector<8x1xf32>
    %cst_20 = arith.constant 3.125000e-02 : f32
    %26 = vector.broadcast %cst_20 : f32 to vector<8x1xf32>
    %27 = arith.mulf %25, %26 : vector<8x1xf32>
    %cst_21 = arith.constant 9.99999997E-7 : f32
    %28 = vector.broadcast %cst_21 : f32 to vector<8x1xf32>
    %29 = arith.addf %27, %28 : vector<8x1xf32>
    %30 = math.rsqrt %29 : vector<8x1xf32>
    %31 = vector.broadcast %30 : vector<8x1xf32> to vector<8x32xf32>
    %32 = arith.mulf %22, %31 : vector<8x32xf32>
    %33 = vector.broadcast %15 : vector<1x32xf32> to vector<8x32xf32>
    %34 = arith.mulf %32, %33 : vector<8x32xf32>
    %35 = vector.broadcast %16 : vector<1x32xf32> to vector<8x32xf32>
    %36 = arith.addf %34, %35 : vector<8x32xf32>
    %c0_22 = arith.constant 0 : index
    %c0_23 = arith.constant 0 : index
    %37 = vector.load %arg8[%c0_22, %c0_23] : memref<8x32xf32, #tpu.memory_space<vmem>>, vector<8x32xf32>
    tpu.vector_store %arg8[%c0_22, %c0_23], %36 {strides = array<i32>} : memref<8x32xf32, #tpu.memory_space<vmem>>, vector<8x32xf32>,
    return
  }
  func.func @transform_0(%arg0: i32) -> (i32, i32) {
    %c0_i32 = arith.constant 0 : i32
    %c0_i32_0 = arith.constant 0 : i32
    return %arg0, %c0_i32 : i32, i32
  }
  func.func @transform_1(%arg0: i32) -> (i32, i32) {
    %c0_i32 = arith.constant 0 : i32
    %c0_i32_0 = arith.constant 0 : i32
    %c0_i32_1 = arith.constant 0 : i32
    return %c0_i32, %c0_i32_0 : i32, i32
  }
  func.func @transform_2(%arg0: i32) -> (i32, i32) {
    %c0_i32 = arith.constant 0 : i32
    %c0_i32_0 = arith.constant 0 : i32
    %c0_i32_1 = arith.constant 0 : i32
    return %c0_i32, %c0_i32_0 : i32, i32
  }
  func.func @transform_3(%arg0: i32) -> (i32, i32) {
    %c0_i32 = arith.constant 0 : i32
    %c0_i32_0 = arith.constant 0 : i32
    %c0_i32_1 = arith.constant 0 : i32
    return %c0_i32, %c0_i32_0 : i32, i32
  }
  func.func @transform_4(%arg0: i32) -> (i32, i32) {
    %c0_i32 = arith.constant 0 : i32
    %c0_i32_0 = arith.constant 0 : i32
    %c0_i32_1 = arith.constant 0 : i32
    return %c0_i32, %c0_i32_0 : i32, i32
  }
  func.func @transform_5(%arg0: i32) -> (i32, i32) {
    %c0_i32 = arith.constant 0 : i32
    %c0_i32_0 = arith.constant 0 : i32
    %c0_i32_1 = arith.constant 0 : i32
    return %c0_i32, %c0_i32_0 : i32, i32
  }
  func.func @transform_6(%arg0: i32) -> (i32, i32) {
    %c0_i32 = arith.constant 0 : i32
    %c0_i32_0 = arith.constant 0 : i32
    %c0_i32_1 = arith.constant 0 : i32
    return %c0_i32, %c0_i32_0 : i32, i32
  }
  func.func @transform_7(%arg0: i32) -> (i32, i32) {
    %c0_i32 = arith.constant 0 : i32
    %c0_i32_0 = arith.constant 0 : i32
    return %arg0, %c0_i32 : i32, i32
  }
}

</mosaic_0001>

<llo_original>
// kernel: tpu_custom_call.1
$region0: #{tpu_custom_call.1}
  #allocation0 [shape = 'u32[]', space=smem, size = 0x4, offset = 0x4, fixed_abs, tag = 'smem constant byte address 0x4 - core index']
  #allocation1 [shape = 'u32[72,128]{1,0:T(1,128)}', space=vmem, size = 0x9000, scoped, tag = 'internal scratch']
  %s0 = inlined_call_operand.vmem [shape: f32[16,32], index: 0, kind: input, shape index: {}]
  %s1 = inlined_call_operand.vmem [shape: f32[32,64], index: 1, kind: input, shape index: {}]
  %s2 = inlined_call_operand.vmem [shape: f32[1,64], index: 2, kind: input, shape index: {}]
  %s3 = inlined_call_operand.vmem [shape: f32[64,32], index: 3, kind: input, shape index: {}]
  %s4 = inlined_call_operand.vmem [shape: f32[1,32], index: 4, kind: input, shape index: {}]
  %s5 = inlined_call_operand.vmem [shape: f32[1,32], index: 5, kind: input, shape index: {}]
  %s6 = inlined_call_operand.vmem [shape: f32[1,32], index: 6, kind: input, shape index: {}]
  %s7 = inlined_call_operand.hbm [shape: f32[16,32], index: 7, kind: output, shape index: {}]
  %s8 = sld [smem:[#allocation0]]
  $region61: #{tpu_custom_call.1} parent=0
    _
  %s10 = ssub.s32 1, %s8
  %s11 = scalar_select 0, %s10, %s8
  $region1: #{tpu_custom_call.1} parent=0
    #allocation2 [shape = 'u8[8192]{0}', space=vmem, size = 0x2000, scoped, tag = 'output window, operand 0']
    #allocation3 [shape = 's32[2]{0}', space=sflag, size = 0x8, scoped, tag = 'scoped memory for tpu_custom_call.1']
    %12 = vsyncpa [#allocation3], 0
    %s13 = scalar_lea.sflag [#allocation3], 1
    %14 = vsyncpa %s13, 0
    loop: start=0, step=1, limit=4
    $region2: #{tpu_custom_call.1} parent=1 // loop_pre_header
      _
    $region3: #{tpu_custom_call.1} parent=1 // loop_header
      %s16 = sphi 0, %s20
      %p17 = scmp.ge.s32.totalorder %s16, 4
      %s26 = sphi 0, %s28
      %s29 = sphi 0, %s26
      %s30 = sphi 0, %s29
      %s46 = sphi 0, %s30
      %s50 = sphi 0, %s50
      %s52 = sphi 0, %s50
      %s53 = sphi 0, %s52
      %s67 = sphi 0, %s53
      %s71 = sphi 0, %s71
      %s73 = sphi 0, %s71
      %s74 = sphi 0, %s73
      %s88 = sphi 0, %s74
      %s92 = sphi 0, %s92
      %s94 = sphi 0, %s92
      %s95 = sphi 0, %s94
      %s109 = sphi 0, %s95
      %s113 = sphi 0, %s113
      %s115 = sphi 0, %s113
      %s116 = sphi 0, %s115
      %s130 = sphi 0, %s116
      %s134 = sphi 0, %s134
      %s136 = sphi 0, %s134
      %s137 = sphi 0, %s136
      %s151 = sphi 0, %s137
      %s155 = sphi 0, %s155
      %s157 = sphi 0, %s155
      %s158 = sphi 0, %s157
      %s172 = sphi 0, %s158
      %s178 = sphi 0, %s180
      %s181 = sphi 0, %s178
      %s182 = sphi 0, %s181
      %s198 = sphi 0, %s182
    $region4: #{tpu_custom_call.1} parent=1 // loop_header_branch
      %19 = sbr.rel (%p17) target = $region8
    $region5: #{tpu_custom_call.1} parent=1 // loop_body
      %s21 = ssub.s32 %s16, 1
      %s22 = ssub.s32 %s16, 2
      %s23 = sadd.s32 %s16, 1
      %s24 = ssub.s32 %s16, %s23
      %p25 = scmp.eq.s32.totalorder %s24, 0
      %s27 = sadd.s32 %s26, 1
      %s28 = scalar_select %p25, %s26, %s27
      %p31 = pneg %p25
      %p32 = scmp.eq.s32.totalorder %s16, 1
      %p33 = por %p31, %p32
      %p34 = scmp.ne.s32.totalorder %s26, %s29
      %p35 = scmp.eq.s32.totalorder %s16, 0
      %p36 = por %p34, %p35
      %p37 = scmp.ne.s32.totalorder %s26, %s29
      %p38 = scmp.eq.s32.totalorder %s21, 1
      %p39 = por %p37, %p38
      %p40 = scmp.ne.s32.totalorder %s29, %s30
      %p41 = scmp.eq.s32.totalorder %s21, 0
      %p42 = por %p40, %p41
      %p43 = scmp.ne.s32.totalorder %s29, %s30
      %p44 = scmp.eq.s32.totalorder %s22, 1
      %p45 = por %p43, %p44
      %p47 = scmp.ne.s32.totalorder %s30, %s46
      %p48 = scmp.eq.s32.totalorder %s22, 0
      %p49 = por %p47, %p48
      %s51 = sadd.s32 %s50, 1
      %p54 = scmp.eq.s32.totalorder %s16, 1
      %p55 = scmp.ne.s32.totalorder %s50, %s52
      %p56 = scmp.eq.s32.totalorder %s16, 0
      %p57 = por %p55, %p56
      %p58 = scmp.ne.s32.totalorder %s50, %s52
      %p59 = scmp.eq.s32.totalorder %s21, 1
      %p60 = por %p58, %p59
      %p61 = scmp.ne.s32.totalorder %s52, %s53
      %p62 = scmp.eq.s32.totalorder %s21, 0
      %p63 = por %p61, %p62
      %p64 = scmp.ne.s32.totalorder %s52, %s53
      %p65 = scmp.eq.s32.totalorder %s22, 1
      %p66 = por %p64, %p65
      %p68 = scmp.ne.s32.totalorder %s53, %s67
      %p69 = scmp.eq.s32.totalorder %s22, 0
      %p70 = por %p68, %p69
      %s72 = sadd.s32 %s71, 1
      %p75 = scmp.eq.s32.totalorder %s16, 1
      %p76 = scmp.ne.s32.totalorder %s71, %s73
      %p77 = scmp.eq.s32.totalorder %s16, 0
      %p78 = por %p76, %p77
      %p79 = scmp.ne.s32.totalorder %s71, %s73
      %p80 = scmp.eq.s32.totalorder %s21, 1
      %p81 = por %p79, %p80
      %p82 = scmp.ne.s32.totalorder %s73, %s74
      %p83 = scmp.eq.s32.totalorder %s21, 0
      %p84 = por %p82, %p83
      %p85 = scmp.ne.s32.totalorder %s73, %s74
      %p86 = scmp.eq.s32.totalorder %s22, 1
      %p87 = por %p85, %p86
      %p89 = scmp.ne.s32.totalorder %s74, %s88
      %p90 = scmp.eq.s32.totalorder %s22, 0
      %p91 = por %p89, %p90
      %s93 = sadd.s32 %s92, 1
      %p96 = scmp.eq.s32.totalorder %s16, 1
      %p97 = scmp.ne.s32.totalorder %s92, %s94
      %p98 = scmp.eq.s32.totalorder %s16, 0
      %p99 = por %p97, %p98
      %p100 = scmp.ne.s32.totalorder %s92, %s94
      %p101 = scmp.eq.s32.totalorder %s21, 1
      %p102 = por %p100, %p101
      %p103 = scmp.ne.s32.totalorder %s94, %s95
      %p104 = scmp.eq.s32.totalorder %s21, 0
      %p105 = por %p103, %p104
      %p106 = scmp.ne.s32.totalorder %s94, %s95
      %p107 = scmp.eq.s32.totalorder %s22, 1
      %p108 = por %p106, %p107
      %p110 = scmp.ne.s32.totalorder %s95, %s109
      %p111 = scmp.eq.s32.totalorder %s22, 0
      %p112 = por %p110, %p111
      %s114 = sadd.s32 %s113, 1
      %p117 = scmp.eq.s32.totalorder %s16, 1
      %p118 = scmp.ne.s32.totalorder %s113, %s115
      %p119 = scmp.eq.s32.totalorder %s16, 0
      %p120 = por %p118, %p119
      %p121 = scmp.ne.s32.totalorder %s113, %s115
      %p122 = scmp.eq.s32.totalorder %s21, 1
      %p123 = por %p121, %p122
      %p124 = scmp.ne.s32.totalorder %s115, %s116
      %p125 = scmp.eq.s32.totalorder %s21, 0
      %p126 = por %p124, %p125
      %p127 = scmp.ne.s32.totalorder %s115, %s116
      %p128 = scmp.eq.s32.totalorder %s22, 1
      %p129 = por %p127, %p128
      %p131 = scmp.ne.s32.totalorder %s116, %s130
      %p132 = scmp.eq.s32.totalorder %s22, 0
      %p133 = por %p131, %p132
      %s135 = sadd.s32 %s134, 1
      %p138 = scmp.eq.s32.totalorder %s16, 1
      %p139 = scmp.ne.s32.totalorder %s134, %s136
      %p140 = scmp.eq.s32.totalorder %s16, 0
      %p141 = por %p139, %p140
      %p142 = scmp.ne.s32.totalorder %s134, %s136
      %p143 = scmp.eq.s32.totalorder %s21, 1
      %p144 = por %p142, %p143
      %p145 = scmp.ne.s32.totalorder %s136, %s137
      %p146 = scmp.eq.s32.totalorder %s21, 0
      %p147 = por %p145, %p146
      %p148 = scmp.ne.s32.totalorder %s136, %s137
      %p149 = scmp.eq.s32.totalorder %s22, 1
      %p150 = por %p148, %p149
      %p152 = scmp.ne.s32.totalorder %s137, %s151
      %p153 = scmp.eq.s32.totalorder %s22, 0
      %p154 = por %p152, %p153
      %s156 = sadd.s32 %s155, 1
      %p159 = scmp.eq.s32.totalorder %s16, 1
      %p160 = scmp.ne.s32.totalorder %s155, %s157
      %p161 = scmp.eq.s32.totalorder %s16, 0
      %p162 = por %p160, %p161
      %p163 = scmp.ne.s32.totalorder %s155, %s157
      %p164 = scmp.eq.s32.totalorder %s21, 1
      %p165 = por %p163, %p164
      %p166 = scmp.ne.s32.totalorder %s157, %s158
      %p167 = scmp.eq.s32.totalorder %s21, 0
      %p168 = por %p166, %p167
      %p169 = scmp.ne.s32.totalorder %s157, %s158
      %p170 = scmp.eq.s32.totalorder %s22, 1
      %p171 = por %p169, %p170
      %p173 = scmp.ne.s32.totalorder %s158, %s172
      %p174 = scmp.eq.s32.totalorder %s22, 0
      %p175 = por %p173, %p174
      %s176 = ssub.s32 %s16, %s23
      %p177 = scmp.eq.s32.totalorder %s176, 0
      %s179 = sadd.s32 %s178, 1
      %s180 = scalar_select %p177, %s178, %s179
      %p183 = pneg %p177
      %p184 = scmp.eq.s32.totalorder %s16, 1
      %p185 = por %p183, %p184
      %p186 = scmp.ne.s32.totalorder %s178, %s181
      %p187 = scmp.eq.s32.totalorder %s16, 0
      %p188 = por %p186, %p187
      %p189 = scmp.ne.s32.totalorder %s178, %s181
      %p190 = scmp.eq.s32.totalorder %s21, 1
      %p191 = por %p189, %p190
      %p192 = scmp.ne.s32.totalorder %s181, %s182
      %p193 = scmp.eq.s32.totalorder %s21, 0
      %p194 = por %p192, %p193
      %p195 = scmp.ne.s32.totalorder %s181, %s182
      %p196 = scmp.eq.s32.totalorder %s22, 1
      %p197 = por %p195, %p196
      %p199 = scmp.ne.s32.totalorder %s182, %s198
      %p200 = scmp.eq.s32.totalorder %s22, 0
      %p201 = por %p199, %p200
      %p202 = scmp.le.s32.totalorder 1, %s16
      %p203 = scmp.lt.s32.totalorder %s16, 3
      %p204 = pnand %p202, %p203
      %p205 = pneg %p204
      // Predicated region
      $region9: #{tpu_custom_call.1} parent=5 // pred_check
        _
      $region10: #{tpu_custom_call.1} parent=5 // pred_check_branch
        %207 = sbr.rel (%p204) target = $region12
      $region11: #{tpu_custom_call.1} parent=5 // pred_region
        %s208 = ssub.s32 %s16, 1
        // Predicated region
        $region13: #{tpu_custom_call.1} parent=11 // pred_check
          %p209 = pneg %p63
        $region14: #{tpu_custom_call.1} parent=11 // pred_check_branch
          %211 = sbr.rel (%p209) target = $region16
        $region15: #{tpu_custom_call.1} parent=11 // pred_region
          _
        $region16: #{tpu_custom_call.1} parent=11 // pred_fallthru
          _
        // Predicated region
        $region17: #{tpu_custom_call.1} parent=11 // pred_check
          %p212 = pneg %p84
        $region18: #{tpu_custom_call.1} parent=11 // pred_check_branch
          %214 = sbr.rel (%p212) target = $region20
        $region19: #{tpu_custom_call.1} parent=11 // pred_region
          _
        $region20: #{tpu_custom_call.1} parent=11 // pred_fallthru
          _
        // Predicated region
        $region21: #{tpu_custom_call.1} parent=11 // pred_check
          %p215 = pneg %p105
        $region22: #{tpu_custom_call.1} parent=11 // pred_check_branch
          %217 = sbr.rel (%p215) target = $region24
        $region23: #{tpu_custom_call.1} parent=11 // pred_region
          _
        $region24: #{tpu_custom_call.1} parent=11 // pred_fallthru
          _
        // Predicated region
        $region25: #{tpu_custom_call.1} parent=11 // pred_check
          %p218 = pneg %p126
        $region26: #{tpu_custom_call.1} parent=11 // pred_check_branch
          %220 = sbr.rel (%p218) target = $region28
        $region27: #{tpu_custom_call.1} parent=11 // pred_region
          _
        $region28: #{tpu_custom_call.1} parent=11 // pred_fallthru
          _
        // Predicated region
        $region29: #{tpu_custom_call.1} parent=11 // pred_check
          %p221 = pneg %p147
        $region30: #{tpu_custom_call.1} parent=11 // pred_check_branch
          %223 = sbr.rel (%p221) target = $region32
        $region31: #{tpu_custom_call.1} parent=11 // pred_region
          _
        $region32: #{tpu_custom_call.1} parent=11 // pred_fallthru
          _
        // Predicated region
        $region33: #{tpu_custom_call.1} parent=11 // pred_check
          %p224 = pneg %p168
        $region34: #{tpu_custom_call.1} parent=11 // pred_check_branch
          %226 = sbr.rel (%p224) target = $region36
        $region35: #{tpu_custom_call.1} parent=11 // pred_region
          _
        $region36: #{tpu_custom_call.1} parent=11 // pred_fallthru
          _
      $region12: #{tpu_custom_call.1} parent=5 // pred_fallthru
        _
      %p227 = scmp.lt.s32.totalorder %s16, 2
      // Predicated region
      $region37: #{tpu_custom_call.1} parent=5 // pred_check
        %p228 = pneg %p227
      $region38: #{tpu_custom_call.1} parent=5 // pred_check_branch
        %230 = sbr.rel (%p228) target = $region40
      $region39: #{tpu_custom_call.1} parent=5 // pred_region
        // Predicated region
        $region41: #{tpu_custom_call.1} parent=39 // pred_check
          %p231 = pneg %p36
        $region42: #{tpu_custom_call.1} parent=39 // pred_check_branch
          %233 = sbr.rel (%p231) target = $region44
        $region43: #{tpu_custom_call.1} parent=39 // pred_region
          %p234 = scmp.lt.s32.totalorder %s16, 1
          %s235 = scalar_select %p234, %s16, 1
          %s236 = smul.addr %s235, 8
          %s237 = scalar_lea.vmem %s0, %s236
        $region44: #{tpu_custom_call.1} parent=39 // pred_fallthru
          _
      $region40: #{tpu_custom_call.1} parent=5 // pred_fallthru
        _
      %p238 = scmp.le.s32.totalorder 1, %s16
      %p239 = scmp.lt.s32.totalorder %s16, 3
      %p240 = pnand %p238, %p239
      %p241 = pneg %p240
      // Predicated region
      $region45: #{tpu_custom_call.1} parent=5 // pred_check
        _
      $region46: #{tpu_custom_call.1} parent=5 // pred_check_branch
        %243 = sbr.rel (%p240) target = $region48
      $region47: #{tpu_custom_call.1} parent=5 // pred_region
        %s244 = ssub.s32 %s16, 1
        %p245 = scmp.lt.s32.totalorder %s21, 1
        %s246 = scalar_select %p245, %s21, 1
        %s247 = smul.addr %s246, 8
        %s248 = scalar_lea.vmem %s0, %s247
        %p249 = pneg %p42
        %p250 = pneg %p39
        %p251 = pneg %p63
        %p252 = pneg %p60
        %p253 = pneg %p84
        %p254 = pneg %p81
        %p255 = pneg %p105
        %p256 = pneg %p102
        %p257 = pneg %p126
        %p258 = pneg %p123
        %p259 = pneg %p147
        %p260 = pneg %p144
        %p261 = pneg %p168
        %p262 = pneg %p165
        %p263 = pneg %p194
        %p264 = pneg %p191
        %s265 = sand.u32 %s181, 1
        %s266 = scalar_lea.sflag [#allocation3], %s265
        %s267 = sand.u32 %s181, 1
        %s268 = smul.addr %s267, 8
        %s269 = scalar_lea.vmem [#allocation2], %s268
        %p270 = scmp.lt.s32.totalorder %s21, 1
        %s271 = scalar_select %p270, %s21, 1
        %s272 = smul.addr %s271, 8
        %s273 = scalar_lea.vmem %s0, %s272
        %v274 = vld [vmem:[%s273] sm:$0xff]
        %v275 = vld [vmem:[%s1] sm:$0xff]
        %v276 = vld [vmem:[%s1 + $0x8] sm:$0xff]
        %v277 = vld [vmem:[%s1 + $0x10] sm:$0xff]
        %v278 = vld [vmem:[%s1 + $0x18] sm:$0xff]
        %v279 = vld [vmem:[%s2] sm:$0x1]
        %v281 = vperm.slane %v279, 0
        %vm283 = vcmask 261120
        %v285 = vsel %vm283, %v274, 0
        %287 = vmatpush.msra.mxu0 0.0
        %288 = vmatpush.msra.mxu0 0.0
        %289 = vmatpush.msra.mxu0 0.0
        %290 = vmatpush.msra.mxu0 0.0
        %291 = vmatpush.msra.mxu0 0.0
        %292 = vmatpush.msra.mxu0 0.0
        %293 = vmatpush.msra.mxu0 0.0
        %294 = vmatpush.msra.mxu0 0.0
        %295 = vmatpush.msra.mxu0 0.0
        %296 = vmatpush.msra.mxu0 0.0
        %297 = vmatpush.msra.mxu0 0.0
        %298 = vmatpush.msra.mxu0 0.0
        %299 = vmatpush.msra.mxu0 %v278
        %300 = vmatpush.msra.mxu0 %v277
        %301 = vmatpush.msra.mxu0 %v276
        %302 = vmatpush.msra.mxu0 %v275
        %303 = vmatmul.f32.gmra.mxu0 %v285
        %v304 = vpop.f32.mrf.mxu0
        %v305 = vadd.f32 %v281, %v304
        %306 = vdwg.mxu0
        %v307 = vmax.f32 %v305, 0.0
        %v308 = vld [vmem:[%s3] sm:$0xff]
        %v309 = vld [vmem:[%s3 + $0x8] sm:$0xff]
        %v310 = vld [vmem:[%s3 + $0x10] sm:$0xff]
        %v311 = vld [vmem:[%s3 + $0x18] sm:$0xff]
        %v312 = vld [vmem:[%s3 + $0x20] sm:$0xff]
        %v313 = vld [vmem:[%s3 + $0x28] sm:$0xff]
        %v314 = vld [vmem:[%s3 + $0x30] sm:$0xff]
        %v315 = vld [vmem:[%s3 + $0x38] sm:$0xff]
        %v316 = vld [vmem:[%s4] sm:$0x1]
        %v318 = vperm.slane %v316, 0
        %vm320 = vcmask 523264
        %v322 = vsel %vm320, %v307, 0
        %324 = vmatpush.msra.mxu0 0.0
        %325 = vmatpush.msra.mxu0 0.0
        %326 = vmatpush.msra.mxu0 0.0
        %327 = vmatpush.msra.mxu0 0.0
        %328 = vmatpush.msra.mxu0 0.0
        %329 = vmatpush.msra.mxu0 0.0
        %330 = vmatpush.msra.mxu0 0.0
        %331 = vmatpush.msra.mxu0 0.0
        %332 = vmatpush.msra.mxu0 %v315
        %333 = vmatpush.msra.mxu0 %v314
        %334 = vmatpush.msra.mxu0 %v313
        %335 = vmatpush.msra.mxu0 %v312
        %336 = vmatpush.msra.mxu0 %v311
        %337 = vmatpush.msra.mxu0 %v310
        %338 = vmatpush.msra.mxu0 %v309
        %339 = vmatpush.msra.mxu0 %v308
        %340 = vmatmul.f32.gmra.mxu0 %v322
        %v341 = vpop.f32.mrf.mxu0
        %v342 = vadd.f32 %v318, %v341
        %343 = vdwg.mxu0
        %v344 = vadd.f32 %v342, %v274
        %v345 = vld [vmem:[%s5] sm:$0x1]
        %v346 = vld [vmem:[%s6] sm:$0x1]
        %v347 = vsel %vm283, %v344, 0.0
        %348 = vadd.xlane.f32.xlu0 %v347
        %v349 = vpop.xlane.xlu0 %348
        %v350 = vmul.f32 %v349, 0.03125
        %v351 = vsub.f32 %v344, %v350
        %v352 = vmul.f32 %v351, %v351
        %v353 = vsel %vm283, %v352, 0.0
        %354 = vadd.xlane.f32.xlu0 %v353
        %v355 = vpop.xlane.xlu0 %354
        %v356 = vmul.f32 %v355, 0.03125
        %v357 = vadd.f32 %v356, 1e-06
        %v358 = vrsqrt.pop %v357
        %v359 = vmul.f32 %v358, %v357
        %v360 = vmul.f32 %v359, %v358
        %v361 = vmul.f32 0.5, %v360
        %v362 = vsub.f32 1.5, %v361
        %v363 = vmul.f32 %v358, %v362
        %vm364 = vweird.f32 %v357
        %vm365 = vweird.f32 %v358
        %vm366 = vmor %vm364, %vm365
        %v367 = vsel %vm366, %v358, %v363
        %v368 = vmul.f32 %v351, %v367
        %v370 = vperm.slane %v345, 0
        %v372 = vmul.f32 %v368, %v370
        %v374 = vperm.slane %v346, 0
        %v376 = vadd.f32 %v372, %v374
        %377 = vst.msk [vmem:[%s269] sm:$0xff] %vm283, %v376
        %s378 = sand.u32 %s181, 1
        %s379 = scalar_lea.sflag [#allocation3], %s378
        %s380 = sand.u32 %s181, 1
        %s381 = smul.addr %s380, 8
        %s382 = scalar_lea.vmem [#allocation2], %s381
        // Predicated region
        $region49: #{tpu_custom_call.1} parent=47 // pred_check
          %p383 = pneg %p191
        $region50: #{tpu_custom_call.1} parent=47 // pred_check_branch
          %385 = sbr.rel (%p383) target = $region52
        $region51: #{tpu_custom_call.1} parent=47 // pred_region
          %387 = vsyncadd %s379, 0
          %s388 = smul.addr %s21, 8
          %s389 = scalar_lea.hbm %s7, %s388
          %s391 = sshll.u32 %s382, 4
          %s392 = int_to_ptr.vmem [resolvable:$true] %s391
          %s393 = sshll.u32 %s389, 4
          %s394 = int_to_ptr.hbm [resolvable:$true] %s393
          %396 = dma.vmem_to_hbm [thread:$0]  %s392, 128, %s394, %s379
        $region52: #{tpu_custom_call.1} parent=47 // pred_fallthru
          _
      $region48: #{tpu_custom_call.1} parent=5 // pred_fallthru
        _
      %p397 = scmp.le.s32.totalorder 2, %s16
      // Predicated region
      $region53: #{tpu_custom_call.1} parent=5 // pred_check
        %p398 = pneg %p397
      $region54: #{tpu_custom_call.1} parent=5 // pred_check_branch
        %400 = sbr.rel (%p398) target = $region56
      $region55: #{tpu_custom_call.1} parent=5 // pred_region
        %s401 = ssub.s32 %s16, 2
        // Predicated region
        $region57: #{tpu_custom_call.1} parent=55 // pred_check
          %p402 = pneg %p197
        $region58: #{tpu_custom_call.1} parent=55 // pred_check_branch
          %404 = sbr.rel (%p402) target = $region60
        $region59: #{tpu_custom_call.1} parent=55 // pred_region
          %s405 = sand.u32 %s182, 1
          %s406 = scalar_lea.sflag [#allocation3], %s405
          %s407 = sand.u32 %s182, 1
          %s408 = smul.addr %s407, 8
          %s409 = scalar_lea.vmem [#allocation2], %s408
          %411 = dma.done %s406, 128
        $region60: #{tpu_custom_call.1} parent=55 // pred_fallthru
          _
      $region56: #{tpu_custom_call.1} parent=5 // pred_fallthru
        _
    $region6: #{tpu_custom_call.1} parent=1 // loop_footer
      %s20 = sadd.s32 1, %s16
    $region7: #{tpu_custom_call.1} parent=1 // loop_footer_branch
      %15 = sbr.rel target = $region3
    $region8: #{tpu_custom_call.1} parent=1 // loop_exit
      _
    %412 = vsyncpa [#allocation3], 1
    %s413 = scalar_lea.sflag [#allocation3], 1
    %414 = vsyncpa %s413, 1

</llo_original>
